<compile_context>
chip_gen: v5e
topology: v5e:2x2
jax: 0.10.0
libtpu: 0.0.40
codegen_flags: <defaults>
</compile_context>

<pallas_src>
import functools

import jax
import jax.numpy as jnp
from jax.experimental import pallas as pl
from jax.experimental.pallas import tpu as pltpu


# Row offsets inside the packed (_C_ROWS, 1) parameter slab (all multiples of 8).
_W1C0 = 0      # w1[:, 0]           rows   0:32
_W1C1 = 32     # w1[:, 1]           rows  32:64
_W4C = 64      # w4 column (32,)    rows  64:96
_B1 = 96       # b1 (32,)           rows  96:128
_B2 = 128      # b2 (16,)           rows 128:144
_B3 = 144      # b3 (32,)           rows 144:176
_B4 = 176      # b4 (1,)            rows 176:177
_C_ROWS = 184  # 177 padded up to a multiple of 8 sublanes


def mlp_kernel(x_ref, w2_ref, w3_ref, c_ref, o_ref):
    """One batch tile of the 4-layer MLP (batch on the lane axis).

    x_ref : (2, TM)    input points (x, t)
    w2_ref: (16, 32)   layer-2 weight, (out, in)
    w3_ref: (32, 16)   layer-3 weight, (out, in)
    c_ref : (184, 1)   packed layer-1/4 weight columns + all biases
    o_ref : (1, TM)    output
    """
    x0 = x_ref[0:1, :]                        # (1, TM)
    x1 = x_ref[1:2, :]                        # (1, TM)

    w1c0 = c_ref[_W1C0:_W1C0 + 32, :]         # (32, 1)
    w1c1 = c_ref[_W1C1:_W1C1 + 32, :]         # (32, 1)
    w4c = c_ref[_W4C:_W4C + 32, :]            # (32, 1)
    b1 = c_ref[_B1:_B1 + 32, :]               # (32, 1)
    b2 = c_ref[_B2:_B2 + 16, :]               # (16, 1)
    b3 = c_ref[_B3:_B3 + 32, :]               # (32, 1)
    b4 = c_ref[_B4:_B4 + 1, :]                # (1, 1)

    # Layer 1 (in_features=2): two broadcast FMAs on the VPU, no MXU.
    h = jnp.tanh(w1c0 * x0 + w1c1 * x1 + b1)                               # (32, TM)

    # Layers 2 & 3: lane-dense MXU matmuls with f32 accumulation.
    h = jnp.tanh(
        jnp.dot(w2_ref[...], h, preferred_element_type=jnp.float32) + b2)  # (16, TM)
    h = jnp.tanh(
        jnp.dot(w3_ref[...], h, preferred_element_type=jnp.float32) + b3)  # (32, TM)

    # Layer 4 (out_features=1): elementwise multiply + sublane reduction (XLU).
    out = jnp.sum(w4c * h, axis=0, keepdims=True) + b4                     # (1, TM)
    o_ref[...] = out.astype(o_ref.dtype)


def _round_up(a, b):
    return (a + b - 1) // b * b


def _pack_columns(params):
    """Pack layer-1/4 weight columns and all biases into a (184, 1) slab."""
    w1 = params["w1"]   # (32, 2)  PyTorch layout (out, in)
    w4 = params["w4"]   # (1, 32)
    cols = jnp.concatenate([
        w1[:, 0], w1[:, 1], w4[0, :],
        params["b1"], params["b2"], params["b3"], params["b4"],
    ]).astype(jnp.float32)                                  # (177,)
    cols = jnp.pad(cols, (0, _C_ROWS - cols.shape[0]))
    return cols.reshape(_C_ROWS, 1)


def model_burgers_forward(x, params, *, tm_max=8192):
    """x: (N, 2) float32; params: PyTorch-layout weights/biases. Returns (N, 1)."""
    N, fin = x.shape
    assert fin == 2
    assert tm_max % 128 == 0

    # ---- batch-tile geometry (batch lives on the lane axis) ----
    n128 = max(_round_up(N, 128), 128)
    # Keep at least 2 grid steps when there is enough work so the 'parallel'
    # axis can shard across both v7x TensorCores; cap tiles at tm_max.
    g = max(pl.cdiv(n128, tm_max), 2 if n128 >= 256 else 1)
    tm = _round_up(pl.cdiv(n128, g), 128)
    np_total = g * tm

    # ---- lane-dense input (2, Np); transpose+pad fuse into one XLA copy ----
    x_t = jnp.pad(x.astype(jnp.float32).T, ((0, 0), (0, np_total - N)))

    w2 = params["w2"].astype(jnp.float32)       # (16, 32)
    w3 = params["w3"].astype(jnp.float32)       # (32, 16)
    col = _pack_columns(params)                 # (184, 1)

    out = pl.pallas_call(
        mlp_kernel,
        out_shape=jax.ShapeDtypeStruct((1, np_total), jnp.float32),
        grid_spec=pltpu.PrefetchScalarGridSpec(
            num_scalar_prefetch=0,
            grid=(g,),
            in_specs=[
                pl.BlockSpec((2, tm), lambda i: (0, i)),    # batch tile
                pl.BlockSpec(w2.shape, lambda i: (0, 0)),   # resident weights
                pl.BlockSpec(w3.shape, lambda i: (0, 0)),
                pl.BlockSpec(col.shape, lambda i: (0, 0)),
            ],
            out_specs=pl.BlockSpec((1, tm), lambda i: (0, i)),
        ),
        compiler_params=pltpu.CompilerParams(
            dimension_semantics=("parallel",)),
    )(x_t, w2, w3, col)

    return out[0, :N].reshape(N, 1)


def init_params(key):
    """PyTorch nn.Linear init: weight (out, in), bias (out,), U(+-1/sqrt(fan_in))."""
    dims = [(2, 32), (32, 16), (16, 32), (32, 1)]
    params = {}
    for idx, (fan_in, fan_out) in enumerate(dims, start=1):
        key, kw, kb = jax.random.split(key, 3)
        bound = fan_in ** -0.5
        params[f"w{idx}"] = jax.random.uniform(
            kw, (fan_out, fan_in), jnp.float32, -bound, bound)
        params[f"b{idx}"] = jax.random.uniform(
            kb, (fan_out,), jnp.float32, -bound, bound)
    return params


def reference_forward(x, params):
    h = x
    for idx in range(1, 5):
        h = jnp.dot(h, params[f"w{idx}"].T,
                    precision=jax.lax.Precision.HIGHEST) + params[f"b{idx}"]
        if idx < 4:
            h = jnp.tanh(h)
    return h


if __name__ == "__main__":
    key = jax.random.PRNGKey(0)
    kp, kx = jax.random.split(key)

    params = init_params(kp)

    # (N, 2) collocation points (x, t); N deliberately not a multiple of 128
    # so the lane-padding / tail path is exercised.
    N = 300
    x = jax.random.uniform(kx, (N, 2), jnp.float32, minval=-1.0, maxval=1.0)

    fwd = jax.jit(functools.partial(model_burgers_forward, tm_max=8192))
    out = jax.block_until_ready(fwd(x, params))

    ref = reference_forward(x, params)
    assert out.shape == (N, 1)
    assert jnp.allclose(out, ref, atol=1e-5, rtol=1e-5), "mismatch vs reference"

    print("KERNEL_OK")
</pallas_src>

<mosaic_0001>
module attributes {stable_mosaic.version = 11 : i64} {
  func.func @mlp_kernel(%arg0: i32, %arg1: memref<2x256xf32, #tpu.memory_space<vmem>>, %arg2: memref<16x32xf32, #tpu.memory_space<vmem>>, %arg3: memref<32x16xf32, #tpu.memory_space<vmem>>, %arg4: memref<184x1xf32, #tpu.memory_space<vmem>>, %arg5: memref<1x256xf32, #tpu.memory_space<vmem>>) attributes {dimension_semantics = [#tpu.dimension_semantics<parallel>], iteration_bounds = array<i64: 2>, scalar_prefetch = 0 : i64, scratch_operands = 0 : i64, tpu.core_type = #tpu.core_type<tc>, window_params = [{transform_indices = @transform_0, window_bounds = array<i64: 2, 256>}, {pipeline_mode = #tpu.pipeline_mode<synchronous>, transform_indices = @transform_1, window_bounds = array<i64: 16, 32>}, {pipeline_mode = #tpu.pipeline_mode<synchronous>, transform_indices = @transform_2, window_bounds = array<i64: 32, 16>}, {pipeline_mode = #tpu.pipeline_mode<synchronous>, transform_indices = @transform_3, window_bounds = array<i64: 184, 1>}, {transform_indices = @transform_4, window_bounds = array<i64: 1, 256>}]} {
    %c0 = arith.constant 0 : index
    %c0_0 = arith.constant 0 : index
    %0 = vector.load %arg1[%c0, %c0_0] : memref<2x256xf32, #tpu.memory_space<vmem>>, vector<1x256xf32>
    %c1 = arith.constant 1 : index
    %c0_1 = arith.constant 0 : index
    %1 = vector.load %arg1[%c1, %c0_1] : memref<2x256xf32, #tpu.memory_space<vmem>>, vector<1x256xf32>
    %c0_2 = arith.constant 0 : index
    %c0_3 = arith.constant 0 : index
    %2 = vector.load %arg4[%c0_2, %c0_3] : memref<184x1xf32, #tpu.memory_space<vmem>>, vector<32x1xf32>
    %c32 = arith.constant 32 : index
    %c0_4 = arith.constant 0 : index
    %3 = vector.load %arg4[%c32, %c0_4] : memref<184x1xf32, #tpu.memory_space<vmem>>, vector<32x1xf32>
    %c64 = arith.constant 64 : index
    %c0_5 = arith.constant 0 : index
    %4 = vector.load %arg4[%c64, %c0_5] : memref<184x1xf32, #tpu.memory_space<vmem>>, vector<32x1xf32>
    %c96 = arith.constant 96 : index
    %c0_6 = arith.constant 0 : index
    %5 = vector.load %arg4[%c96, %c0_6] : memref<184x1xf32, #tpu.memory_space<vmem>>, vector<32x1xf32>
    %c128 = arith.constant 128 : index
    %c0_7 = arith.constant 0 : index
    %6 = vector.load %arg4[%c128, %c0_7] : memref<184x1xf32, #tpu.memory_space<vmem>>, vector<16x1xf32>
    %c144 = arith.constant 144 : index
    %c0_8 = arith.constant 0 : index
    %7 = vector.load %arg4[%c144, %c0_8] : memref<184x1xf32, #tpu.memory_space<vmem>>, vector<32x1xf32>
    %c176 = arith.constant 176 : index
    %c0_9 = arith.constant 0 : index
    %8 = vector.load %arg4[%c176, %c0_9] : memref<184x1xf32, #tpu.memory_space<vmem>>, vector<1x1xf32>
    %9 = vector.broadcast %2 : vector<32x1xf32> to vector<32x256xf32>
    %10 = vector.broadcast %0 : vector<1x256xf32> to vector<32x256xf32>
    %11 = arith.mulf %9, %10 : vector<32x256xf32>
    %12 = vector.broadcast %3 : vector<32x1xf32> to vector<32x256xf32>
    %13 = vector.broadcast %1 : vector<1x256xf32> to vector<32x256xf32>
    %14 = arith.mulf %12, %13 : vector<32x256xf32>
    %15 = arith.addf %11, %14 : vector<32x256xf32>
    %16 = vector.broadcast %5 : vector<32x1xf32> to vector<32x256xf32>
    %17 = arith.addf %15, %16 : vector<32x256xf32>
    %18 = math.tanh %17 : vector<32x256xf32>
    %c0_10 = arith.constant 0 : index
    %c0_11 = arith.constant 0 : index
    %19 = vector.load %arg2[%c0_10, %c0_11] : memref<16x32xf32, #tpu.memory_space<vmem>>, vector<16x32xf32>
    %cst = arith.constant dense<0.000000e+00> : vector<16x256xf32>
    %20 = tpu.matmul %19, %18, %cst {dimension_numbers = #tpu.dot_dimension_numbers<[1], [0], [0], [1], [0, 0, 1, 1], [], []>} : vector<16x32xf32>, vector<32x256xf32>, vector<16x256xf32> -> vector<16x256xf32>
    %21 = vector.broadcast %6 : vector<16x1xf32> to vector<16x256xf32>
    %22 = arith.addf %20, %21 : vector<16x256xf32>
    %23 = math.tanh %22 : vector<16x256xf32>
    %c0_12 = arith.constant 0 : index
    %c0_13 = arith.constant 0 : index
    %24 = vector.load %arg3[%c0_12, %c0_13] : memref<32x16xf32, #tpu.memory_space<vmem>>, vector<32x16xf32>
    %cst_14 = arith.constant dense<0.000000e+00> : vector<32x256xf32>
    %25 = tpu.matmul %24, %23, %cst_14 {dimension_numbers = #tpu.dot_dimension_numbers<[1], [0], [0], [1], [0, 0, 1, 1], [], []>} : vector<32x16xf32>, vector<16x256xf32>, vector<32x256xf32> -> vector<32x256xf32>
    %26 = vector.broadcast %7 : vector<32x1xf32> to vector<32x256xf32>
    %27 = arith.addf %25, %26 : vector<32x256xf32>
    %28 = math.tanh %27 : vector<32x256xf32>
    %29 = vector.broadcast %4 : vector<32x1xf32> to vector<32x256xf32>
    %30 = arith.mulf %29, %28 : vector<32x256xf32>
    %cst_15 = arith.constant dense<0.000000e+00> : vector<256xf32>
    %31 = vector.multi_reduction <add>, %30, %cst_15 [0] : vector<32x256xf32> to vector<256xf32>
    %32 = vector.shape_cast %31 : vector<256xf32> to vector<1x256xf32>
    %33 = vector.broadcast %8 : vector<1x1xf32> to vector<1x256xf32>
    %34 = arith.addf %32, %33 : vector<1x256xf32>
    %c0_16 = arith.constant 0 : index
    %c0_17 = arith.constant 0 : index
    %35 = vector.load %arg5[%c0_16, %c0_17] : memref<1x256xf32, #tpu.memory_space<vmem>>, vector<1x256xf32>
    tpu.vector_store %arg5[%c0_16, %c0_17], %34 {strides = array<i32>} : memref<1x256xf32, #tpu.memory_space<vmem>>, vector<1x256xf32>,
    return
  }
  func.func @transform_0(%arg0: i32) -> (i32, i32) {
    %c0_i32 = arith.constant 0 : i32
    %c0_i32_0 = arith.constant 0 : i32
    return %c0_i32, %arg0 : i32, i32
  }
  func.func @transform_1(%arg0: i32) -> (i32, i32) {
    %c0_i32 = arith.constant 0 : i32
    %c0_i32_0 = arith.constant 0 : i32
    %c0_i32_1 = arith.constant 0 : i32
    return %c0_i32, %c0_i32_0 : i32, i32
  }
  func.func @transform_2(%arg0: i32) -> (i32, i32) {
    %c0_i32 = arith.constant 0 : i32
    %c0_i32_0 = arith.constant 0 : i32
    %c0_i32_1 = arith.constant 0 : i32
    return %c0_i32, %c0_i32_0 : i32, i32
  }
  func.func @transform_3(%arg0: i32) -> (i32, i32) {
    %c0_i32 = arith.constant 0 : i32
    %c0_i32_0 = arith.constant 0 : i32
    %c0_i32_1 = arith.constant 0 : i32
    return %c0_i32, %c0_i32_0 : i32, i32
  }
  func.func @transform_4(%arg0: i32) -> (i32, i32) {
    %c0_i32 = arith.constant 0 : i32
    %c0_i32_0 = arith.constant 0 : i32
    return %c0_i32, %arg0 : i32, i32
  }
}

</mosaic_0001>

<llo_original>
// kernel: model_burgers_forward.1
$region0: #{model_burgers_forward.1}
  #allocation0 [shape = 'u32[]', space=smem, size = 0x4, offset = 0x4, fixed_abs, tag = 'smem constant byte address 0x4 - core index']
  #allocation1 [shape = 'u32[72,128]{1,0:T(1,128)}', space=vmem, size = 0x9000, scoped, tag = 'internal scratch']
  %s0 = inlined_call_operand.vmem [shape: f32[2,512], index: 0, kind: input, shape index: {}]
  %s1 = inlined_call_operand.vmem [shape: f32[16,32], index: 1, kind: input, shape index: {}]
  %s2 = inlined_call_operand.vmem [shape: f32[32,16], index: 2, kind: input, shape index: {}]
  %s3 = inlined_call_operand.vmem [shape: f32[184,1], index: 3, kind: input, shape index: {}]
  %s4 = inlined_call_operand.vmem [shape: f32[1,512], index: 4, kind: output, shape index: {}]
  %s5 = sld [smem:[#allocation0]]
  $region49: #{model_burgers_forward.1} parent=0
    _
  %s7 = ssub.s32 1, %s5
  %s8 = scalar_select 0, %s7, %s5
  loop: start=0, step=1, limit=4
  $region2: #{model_burgers_forward.1} parent=0 // loop_pre_header
    _
  $region3: #{model_burgers_forward.1} parent=0 // loop_header
    %s10 = sphi 0, %s14
    %p11 = scmp.ge.s32.totalorder %s10, 4
    %s20 = sphi 0, %s22
    %s23 = sphi 0, %s20
    %s24 = sphi 0, %s23
    %s40 = sphi 0, %s24
    %s44 = sphi 0, %s44
    %s46 = sphi 0, %s44
    %s47 = sphi 0, %s46
    %s61 = sphi 0, %s47
    %s65 = sphi 0, %s65
    %s67 = sphi 0, %s65
    %s68 = sphi 0, %s67
    %s82 = sphi 0, %s68
    %s86 = sphi 0, %s86
    %s88 = sphi 0, %s86
    %s89 = sphi 0, %s88
    %s103 = sphi 0, %s89
    %s109 = sphi 0, %s111
    %s112 = sphi 0, %s109
    %s113 = sphi 0, %s112
    %s129 = sphi 0, %s113
  $region4: #{model_burgers_forward.1} parent=0 // loop_header_branch
    %13 = sbr.rel (%p11) target = $region8
  $region5: #{model_burgers_forward.1} parent=0 // loop_body
    %s15 = ssub.s32 %s10, 1
    %s16 = ssub.s32 %s10, 2
    %s17 = sadd.s32 %s10, 1
    %s18 = ssub.s32 %s10, %s17
    %p19 = scmp.eq.s32.totalorder %s18, 0
    %s21 = sadd.s32 %s20, 1
    %s22 = scalar_select %p19, %s20, %s21
    %p25 = pneg %p19
    %p26 = scmp.eq.s32.totalorder %s10, 1
    %p27 = por %p25, %p26
    %p28 = scmp.ne.s32.totalorder %s20, %s23
    %p29 = scmp.eq.s32.totalorder %s10, 0
    %p30 = por %p28, %p29
    %p31 = scmp.ne.s32.totalorder %s20, %s23
    %p32 = scmp.eq.s32.totalorder %s15, 1
    %p33 = por %p31, %p32
    %p34 = scmp.ne.s32.totalorder %s23, %s24
    %p35 = scmp.eq.s32.totalorder %s15, 0
    %p36 = por %p34, %p35
    %p37 = scmp.ne.s32.totalorder %s23, %s24
    %p38 = scmp.eq.s32.totalorder %s16, 1
    %p39 = por %p37, %p38
    %p41 = scmp.ne.s32.totalorder %s24, %s40
    %p42 = scmp.eq.s32.totalorder %s16, 0
    %p43 = por %p41, %p42
    %s45 = sadd.s32 %s44, 1
    %p48 = scmp.eq.s32.totalorder %s10, 1
    %p49 = scmp.ne.s32.totalorder %s44, %s46
    %p50 = scmp.eq.s32.totalorder %s10, 0
    %p51 = por %p49, %p50
    %p52 = scmp.ne.s32.totalorder %s44, %s46
    %p53 = scmp.eq.s32.totalorder %s15, 1
    %p54 = por %p52, %p53
    %p55 = scmp.ne.s32.totalorder %s46, %s47
    %p56 = scmp.eq.s32.totalorder %s15, 0
    %p57 = por %p55, %p56
    %p58 = scmp.ne.s32.totalorder %s46, %s47
    %p59 = scmp.eq.s32.totalorder %s16, 1
    %p60 = por %p58, %p59
    %p62 = scmp.ne.s32.totalorder %s47, %s61
    %p63 = scmp.eq.s32.totalorder %s16, 0
    %p64 = por %p62, %p63
    %s66 = sadd.s32 %s65, 1
    %p69 = scmp.eq.s32.totalorder %s10, 1
    %p70 = scmp.ne.s32.totalorder %s65, %s67
    %p71 = scmp.eq.s32.totalorder %s10, 0
    %p72 = por %p70, %p71
    %p73 = scmp.ne.s32.totalorder %s65, %s67
    %p74 = scmp.eq.s32.totalorder %s15, 1
    %p75 = por %p73, %p74
    %p76 = scmp.ne.s32.totalorder %s67, %s68
    %p77 = scmp.eq.s32.totalorder %s15, 0
    %p78 = por %p76, %p77
    %p79 = scmp.ne.s32.totalorder %s67, %s68
    %p80 = scmp.eq.s32.totalorder %s16, 1
    %p81 = por %p79, %p80
    %p83 = scmp.ne.s32.totalorder %s68, %s82
    %p84 = scmp.eq.s32.totalorder %s16, 0
    %p85 = por %p83, %p84
    %s87 = sadd.s32 %s86, 1
    %p90 = scmp.eq.s32.totalorder %s10, 1
    %p91 = scmp.ne.s32.totalorder %s86, %s88
    %p92 = scmp.eq.s32.totalorder %s10, 0
    %p93 = por %p91, %p92
    %p94 = scmp.ne.s32.totalorder %s86, %s88
    %p95 = scmp.eq.s32.totalorder %s15, 1
    %p96 = por %p94, %p95
    %p97 = scmp.ne.s32.totalorder %s88, %s89
    %p98 = scmp.eq.s32.totalorder %s15, 0
    %p99 = por %p97, %p98
    %p100 = scmp.ne.s32.totalorder %s88, %s89
    %p101 = scmp.eq.s32.totalorder %s16, 1
    %p102 = por %p100, %p101
    %p104 = scmp.ne.s32.totalorder %s89, %s103
    %p105 = scmp.eq.s32.totalorder %s16, 0
    %p106 = por %p104, %p105
    %s107 = ssub.s32 %s10, %s17
    %p108 = scmp.eq.s32.totalorder %s107, 0
    %s110 = sadd.s32 %s109, 1
    %s111 = scalar_select %p108, %s109, %s110
    %p114 = pneg %p108
    %p115 = scmp.eq.s32.totalorder %s10, 1
    %p116 = por %p114, %p115
    %p117 = scmp.ne.s32.totalorder %s109, %s112
    %p118 = scmp.eq.s32.totalorder %s10, 0
    %p119 = por %p117, %p118
    %p120 = scmp.ne.s32.totalorder %s109, %s112
    %p121 = scmp.eq.s32.totalorder %s15, 1
    %p122 = por %p120, %p121
    %p123 = scmp.ne.s32.totalorder %s112, %s113
    %p124 = scmp.eq.s32.totalorder %s15, 0
    %p125 = por %p123, %p124
    %p126 = scmp.ne.s32.totalorder %s112, %s113
    %p127 = scmp.eq.s32.totalorder %s16, 1
    %p128 = por %p126, %p127
    %p130 = scmp.ne.s32.totalorder %s113, %s129
    %p131 = scmp.eq.s32.totalorder %s16, 0
    %p132 = por %p130, %p131
    %p133 = scmp.le.s32.totalorder 1, %s10
    %p134 = scmp.lt.s32.totalorder %s10, 3
    %p135 = pnand %p133, %p134
    %p136 = pneg %p135
    // Predicated region
    $region9: #{model_burgers_forward.1} parent=5 // pred_check
      _
    $region10: #{model_burgers_forward.1} parent=5 // pred_check_branch
      %138 = sbr.rel (%p135) target = $region12
    $region11: #{model_burgers_forward.1} parent=5 // pred_region
      %s139 = ssub.s32 %s10, 1
      // Predicated region
      $region13: #{model_burgers_forward.1} parent=11 // pred_check
        %p140 = pneg %p57
      $region14: #{model_burgers_forward.1} parent=11 // pred_check_branch
        %142 = sbr.rel (%p140) target = $region16
      $region15: #{model_burgers_forward.1} parent=11 // pred_region
        _
      $region16: #{model_burgers_forward.1} parent=11 // pred_fallthru
        _
      // Predicated region
      $region17: #{model_burgers_forward.1} parent=11 // pred_check
        %p143 = pneg %p78
      $region18: #{model_burgers_forward.1} parent=11 // pred_check_branch
        %145 = sbr.rel (%p143) target = $region20
      $region19: #{model_burgers_forward.1} parent=11 // pred_region
        _
      $region20: #{model_burgers_forward.1} parent=11 // pred_fallthru
        _
      // Predicated region
      $region21: #{model_burgers_forward.1} parent=11 // pred_check
        %p146 = pneg %p99
      $region22: #{model_burgers_forward.1} parent=11 // pred_check_branch
        %148 = sbr.rel (%p146) target = $region24
      $region23: #{model_burgers_forward.1} parent=11 // pred_region
        _
      $region24: #{model_burgers_forward.1} parent=11 // pred_fallthru
        _
    $region12: #{model_burgers_forward.1} parent=5 // pred_fallthru
      _
    %p149 = scmp.lt.s32.totalorder %s10, 2
    // Predicated region
    $region25: #{model_burgers_forward.1} parent=5 // pred_check
      %p150 = pneg %p149
    $region26: #{model_burgers_forward.1} parent=5 // pred_check_branch
      %152 = sbr.rel (%p150) target = $region28
    $region27: #{model_burgers_forward.1} parent=5 // pred_region
      // Predicated region
      $region29: #{model_burgers_forward.1} parent=27 // pred_check
        %p153 = pneg %p30
      $region30: #{model_burgers_forward.1} parent=27 // pred_check_branch
        %155 = sbr.rel (%p153) target = $region32
      $region31: #{model_burgers_forward.1} parent=27 // pred_region
        %s156 = smul.u32 2, %s10
        %p157 = scmp.lt.s32.totalorder %s156, 3
        %s158 = scalar_select %p157, %s156, 3
        %s159 = smul.addr %s158, 2
        %s160 = scalar_lea.vmem %s0, %s159
        %s161 = smul.u32 2, %s10
      $region32: #{model_burgers_forward.1} parent=27 // pred_fallthru
        _
    $region28: #{model_burgers_forward.1} parent=5 // pred_fallthru
      _
    %p162 = scmp.le.s32.totalorder 1, %s10
    %p163 = scmp.lt.s32.totalorder %s10, 3
    %p164 = pnand %p162, %p163
    %p165 = pneg %p164
    // Predicated region
    $region33: #{model_burgers_forward.1} parent=5 // pred_check
      _
    $region34: #{model_burgers_forward.1} parent=5 // pred_check_branch
      %167 = sbr.rel (%p164) target = $region36
    $region35: #{model_burgers_forward.1} parent=5 // pred_region
      %s168 = ssub.s32 %s10, 1
      %s169 = smul.u32 2, %s15
      %p170 = scmp.lt.s32.totalorder %s169, 3
      %s171 = scalar_select %p170, %s169, 3
      %s172 = smul.addr %s171, 2
      %s173 = scalar_lea.vmem %s0, %s172
      %p174 = pneg %p36
      %p175 = pneg %p33
      %p176 = pneg %p57
      %p177 = pneg %p54
      %p178 = pneg %p78
      %p179 = pneg %p75
      %p180 = pneg %p99
      %p181 = pneg %p96
      %p182 = pneg %p125
      %p183 = pneg %p122
      %s184 = smul.u32 2, %s15
      %p185 = scmp.lt.s32.totalorder %s184, 3
      %s186 = scalar_select %p185, %s184, 3
      %s187 = scalar_lea.vmem %s4, %s186
      %s188 = smul.u32 2, %s15
      %p189 = scmp.lt.s32.totalorder %s188, 3
      %s190 = scalar_select %p189, %s188, 3
      %s191 = smul.addr %s190, 2
      %s192 = scalar_lea.vmem %s0, %s191
      %s193 = smul.u32 2, %s15
      %s194 = smul.u32 2, %s15
      %p195 = scmp.lt.s32.totalorder %s194, 3
      %s196 = scalar_select %p195, %s194, 3
      %s197 = scalar_lea.vmem %s4, %s196
      %s198 = smul.u32 2, %s15
      %v199 = vld [vmem:[%s192] ss:$2 sm:$0x3]
      %s200 = scalar_lea.vmem %s192, 1
      %v201 = vld [vmem:[%s200] ss:$2 sm:$0x3]
      %v202 = vld [vmem:[%s3] sm:$0xff]
      %v203 = vld [vmem:[%s3 + $0x8] sm:$0xff]
      %v204 = vld [vmem:[%s3 + $0x10] sm:$0xff]
      %v205 = vld [vmem:[%s3 + $0x18] sm:$0xff]
      %v206 = vld [vmem:[%s3 + $0x20] sm:$0xff]
      %v207 = vld [vmem:[%s3 + $0x28] sm:$0xff]
      %v208 = vld [vmem:[%s3 + $0x30] sm:$0xff]
      %v209 = vld [vmem:[%s3 + $0x38] sm:$0xff]
      %v210 = vld [vmem:[%s3 + $0x40] sm:$0xff]
      %v211 = vld [vmem:[%s3 + $0x48] sm:$0xff]
      %v212 = vld [vmem:[%s3 + $0x50] sm:$0xff]
      %v213 = vld [vmem:[%s3 + $0x58] sm:$0xff]
      %v214 = vld [vmem:[%s3 + $0x60] sm:$0xff]
      %v215 = vld [vmem:[%s3 + $0x68] sm:$0xff]
      %v216 = vld [vmem:[%s3 + $0x70] sm:$0xff]
      %v217 = vld [vmem:[%s3 + $0x78] sm:$0xff]
      %v218 = vld [vmem:[%s3 + $0x80] sm:$0xff]
      %v219 = vld [vmem:[%s3 + $0x88] sm:$0xff]
      %v220 = vld [vmem:[%s3 + $0x90] sm:$0xff]
      %v221 = vld [vmem:[%s3 + $0x98] sm:$0xff]
      %v222 = vld [vmem:[%s3 + $0xa0] sm:$0xff]
      %v223 = vld [vmem:[%s3 + $0xa8] sm:$0xff]
      %v224 = vld [vmem:[%s3 + $0xb0] sm:$0x1]
      %226 = vset.pattern.permute.xlu0 0
      %227 = vperm.xlu0 %226, %v202
      %v228 = vpop.permute.xlu0 %227
      %231 = vset.pattern.permute.xlu0 0
      %232 = vperm.xlu0 %231, %v203
      %v233 = vpop.permute.xlu0 %232
      %236 = vset.pattern.permute.xlu0 0
      %237 = vperm.xlu0 %236, %v204
      %v238 = vpop.permute.xlu0 %237
      %241 = vset.pattern.permute.xlu0 0
      %242 = vperm.xlu0 %241, %v205
      %v243 = vpop.permute.xlu0 %242
      %v246 = vperm.slane %v199, 0
      %v247 = vperm.slane %v199, 1
      %v250 = vmul.f32 %v228, %v246
      %v251 = vmul.f32 %v228, %v247
      %v252 = vmul.f32 %v233, %v246
      %v253 = vmul.f32 %v233, %v247
      %v254 = vmul.f32 %v238, %v246
      %v255 = vmul.f32 %v238, %v247
      %v256 = vmul.f32 %v243, %v246
      %v257 = vmul.f32 %v243, %v247
      %259 = vset.pattern.permute.xlu0 0
      %260 = vperm.xlu0 %259, %v206
      %v261 = vpop.permute.xlu0 %260
      %264 = vset.pattern.permute.xlu0 0
      %265 = vperm.xlu0 %264, %v207
      %v266 = vpop.permute.xlu0 %265
      %269 = vset.pattern.permute.xlu0 0
      %270 = vperm.xlu0 %269, %v208
      %v271 = vpop.permute.xlu0 %270
      %274 = vset.pattern.permute.xlu0 0
      %275 = vperm.xlu0 %274, %v209
      %v276 = vpop.permute.xlu0 %275
      %v279 = vperm.slane %v201, 0
      %v280 = vperm.slane %v201, 1
      %v283 = vmul.f32 %v261, %v279
      %v284 = vmul.f32 %v261, %v280
      %v285 = vmul.f32 %v266, %v279
      %v286 = vmul.f32 %v266, %v280
      %v287 = vmul.f32 %v271, %v279
      %v288 = vmul.f32 %v271, %v280
      %v289 = vmul.f32 %v276, %v279
      %v290 = vmul.f32 %v276, %v280
      %v291 = vadd.f32 %v250, %v283
      %v292 = vadd.f32 %v251, %v284
      %v293 = vadd.f32 %v252, %v285
      %v294 = vadd.f32 %v253, %v286
      %v295 = vadd.f32 %v254, %v287
      %v296 = vadd.f32 %v255, %v288
      %v297 = vadd.f32 %v256, %v289
      %v298 = vadd.f32 %v257, %v290
      %300 = vset.pattern.permute.xlu0 0
      %301 = vperm.xlu0 %300, %v214
      %v302 = vpop.permute.xlu0 %301
      %305 = vset.pattern.permute.xlu0 0
      %306 = vperm.xlu0 %305, %v215
      %v307 = vpop.permute.xlu0 %306
      %310 = vset.pattern.permute.xlu0 0
      %311 = vperm.xlu0 %310, %v216
      %v312 = vpop.permute.xlu0 %311
      %315 = vset.pattern.permute.xlu0 0
      %316 = vperm.xlu0 %315, %v217
      %v317 = vpop.permute.xlu0 %316
      %v319 = vadd.f32 %v291, %v302
      %v320 = vadd.f32 %v292, %v302
      %v321 = vadd.f32 %v293, %v307
      %v322 = vadd.f32 %v294, %v307
      %v323 = vadd.f32 %v295, %v312
      %v324 = vadd.f32 %v296, %v312
      %v325 = vadd.f32 %v297, %v317
      %v326 = vadd.f32 %v298, %v317
      %v327 = vtanh.pop %v319
      %v328 = vtanh.pop %v320
      %v329 = vtanh.pop %v321
      %v330 = vtanh.pop %v322
      %v331 = vtanh.pop %v323
      %v332 = vtanh.pop %v324
      %v333 = vtanh.pop %v325
      %v334 = vtanh.pop %v326
      %v335 = vld [vmem:[%s1] sm:$0xff]
      %v336 = vld [vmem:[%s1 + $0x8] sm:$0xff]
      %338 = vset.pattern.permute.xlu0 0
      %339 = vperm.xlu0 %338, %v218
      %v340 = vpop.permute.xlu0 %339
      %343 = vset.pattern.permute.xlu0 0
      %344 = vperm.xlu0 %343, %v219
      %v345 = vpop.permute.xlu0 %344
      %vm347 = vcmask 261120
      %v349 = vsel %vm347, %v335, 0
      %v352 = vsel %vm347, %v336, 0
      %354 = vmatpush.msra.mxu0 0.0
      %355 = vmatpush.msra.mxu0 0.0
      %356 = vmatpush.msra.mxu0 0.0
      %357 = vmatpush.msra.mxu0 0.0
      %358 = vmatpush.msra.mxu0 0.0
      %359 = vmatpush.msra.mxu0 0.0
      %360 = vmatpush.msra.mxu0 0.0
      %361 = vmatpush.msra.mxu0 0.0
      %362 = vmatpush.msra.mxu0 0.0
      %363 = vmatpush.msra.mxu0 0.0
      %364 = vmatpush.msra.mxu0 0.0
      %365 = vmatpush.msra.mxu0 0.0
      %366 = vmatpush.msra.mxu0 %v333
      %367 = vmatpush.msra.mxu0 %v331
      %368 = vmatpush.msra.mxu0 %v329
      %369 = vmatpush.msra.mxu0 %v327
      %370 = vmatmul.f32.gmra.mxu0 %v349
      %v371 = vpop.f32.mrf.mxu0
      %v372 = vadd.f32 %v340, %v371
      %373 = vmatmul.f32.gmra.mxu0 %v352
      %v374 = vpop.f32.mrf.mxu0
      %v375 = vadd.f32 %v345, %v374
      %376 = vdwg.mxu0
      %377 = vmatpush.msra.mxu0 0.0
      %378 = vmatpush.msra.mxu0 0.0
      %379 = vmatpush.msra.mxu0 0.0
      %380 = vmatpush.msra.mxu0 0.0
      %381 = vmatpush.msra.mxu0 0.0
      %382 = vmatpush.msra.mxu0 0.0
      %383 = vmatpush.msra.mxu0 0.0
      %384 = vmatpush.msra.mxu0 0.0
      %385 = vmatpush.msra.mxu0 0.0
      %386 = vmatpush.msra.mxu0 0.0
      %387 = vmatpush.msra.mxu0 0.0
      %388 = vmatpush.msra.mxu0 0.0
      %389 = vmatpush.msra.mxu0 %v334
      %390 = vmatpush.msra.mxu0 %v332
      %391 = vmatpush.msra.mxu0 %v330
      %392 = vmatpush.msra.mxu0 %v328
      %393 = vmatmul.f32.gmra.mxu0 %v349
      %v394 = vpop.f32.mrf.mxu0
      %v395 = vadd.f32 %v340, %v394
      %396 = vmatmul.f32.gmra.mxu0 %v352
      %v397 = vpop.f32.mrf.mxu0
      %v398 = vadd.f32 %v345, %v397
      %399 = vdwg.mxu0
      %v400 = vtanh.pop %v372
      %v401 = vtanh.pop %v395
      %v402 = vtanh.pop %v375
      %v403 = vtanh.pop %v398
      %v404 = vld [vmem:[%s2] sm:$0xff]
      %v405 = vld [vmem:[%s2 + $0x8] sm:$0xff]
      %v406 = vld [vmem:[%s2 + $0x10] sm:$0xff]
      %v407 = vld [vmem:[%s2 + $0x18] sm:$0xff]
      %409 = vset.pattern.permute.xlu0 0
      %410 = vperm.xlu0 %409, %v220
      %v411 = vpop.permute.xlu0 %410
      %414 = vset.pattern.permute.xlu0 0
      %415 = vperm.xlu0 %414, %v221
      %v416 = vpop.permute.xlu0 %415
      %419 = vset.pattern.permute.xlu0 0
      %420 = vperm.xlu0 %419, %v222
      %v421 = vpop.permute.xlu0 %420
      %424 = vset.pattern.permute.xlu0 0
      %425 = vperm.xlu0 %424, %v223
      %v426 = vpop.permute.xlu0 %425
      %vm428 = vcmask 130048
      %v430 = vsel %vm428, %v404, 0
      %v433 = vsel %vm428, %v405, 0
      %v436 = vsel %vm428, %v406, 0
      %v439 = vsel %vm428, %v407, 0
      %441 = vmatpush.msra.mxu0 0.0
      %442 = vmatpush.msra.mxu0 0.0
      %443 = vmatpush.msra.mxu0 0.0
      %444 = vmatpush.msra.mxu0 0.0
      %445 = vmatpush.msra.mxu0 0.0
      %446 = vmatpush.msra.mxu0 0.0
      %447 = vmatpush.msra.mxu0 0.0
      %448 = vmatpush.msra.mxu0 0.0
      %449 = vmatpush.msra.mxu0 0.0
      %450 = vmatpush.msra.mxu0 0.0
      %451 = vmatpush.msra.mxu0 0.0
      %452 = vmatpush.msra.mxu0 0.0
      %453 = vmatpush.msra.mxu0 0.0
      %454 = vmatpush.msra.mxu0 0.0
      %455 = vmatpush.msra.mxu0 %v402
      %456 = vmatpush.msra.mxu0 %v400
      %457 = vmatmul.f32.gmra.mxu0 %v430
      %v458 = vpop.f32.mrf.mxu0
      %v459 = vadd.f32 %v411, %v458
      %460 = vmatmul.f32.gmra.mxu0 %v433
      %v461 = vpop.f32.mrf.mxu0
      %v462 = vadd.f32 %v416, %v461
      %463 = vmatmul.f32.gmra.mxu0 %v436
      %v464 = vpop.f32.mrf.mxu0
      %v465 = vadd.f32 %v421, %v464
      %466 = vmatmul.f32.gmra.mxu0 %v439
      %v467 = vpop.f32.mrf.mxu0
      %v468 = vadd.f32 %v426, %v467
      %469 = vdwg.mxu0
      %470 = vmatpush.msra.mxu0 0.0
      %471 = vmatpush.msra.mxu0 0.0
      %472 = vmatpush.msra.mxu0 0.0
      %473 = vmatpush.msra.mxu0 0.0
      %474 = vmatpush.msra.mxu0 0.0
      %475 = vmatpush.msra.mxu0 0.0
      %476 = vmatpush.msra.mxu0 0.0
      %477 = vmatpush.msra.mxu0 0.0
      %478 = vmatpush.msra.mxu0 0.0
      %479 = vmatpush.msra.mxu0 0.0
      %480 = vmatpush.msra.mxu0 0.0
      %481 = vmatpush.msra.mxu0 0.0
      %482 = vmatpush.msra.mxu0 0.0
      %483 = vmatpush.msra.mxu0 0.0
      %484 = vmatpush.msra.mxu0 %v403
      %485 = vmatpush.msra.mxu0 %v401
      %486 = vmatmul.f32.gmra.mxu0 %v430
      %v487 = vpop.f32.mrf.mxu0
      %v488 = vadd.f32 %v411, %v487
      %489 = vmatmul.f32.gmra.mxu0 %v433
      %v490 = vpop.f32.mrf.mxu0
      %v491 = vadd.f32 %v416, %v490
      %492 = vmatmul.f32.gmra.mxu0 %v436
      %v493 = vpop.f32.mrf.mxu0
      %v494 = vadd.f32 %v421, %v493
      %495 = vmatmul.f32.gmra.mxu0 %v439
      %v496 = vpop.f32.mrf.mxu0
      %v497 = vadd.f32 %v426, %v496
      %498 = vdwg.mxu0
      %v499 = vtanh.pop %v459
      %v500 = vtanh.pop %v488
      %v501 = vtanh.pop %v462
      %v502 = vtanh.pop %v491
      %v503 = vtanh.pop %v465
      %v504 = vtanh.pop %v494
      %v505 = vtanh.pop %v468
      %v506 = vtanh.pop %v497
      %508 = vset.pattern.permute.xlu0 0
      %509 = vperm.xlu0 %508, %v210
      %v510 = vpop.permute.xlu0 %509
      %513 = vset.pattern.permute.xlu0 0
      %514 = vperm.xlu0 %513, %v211
      %v515 = vpop.permute.xlu0 %514
      %518 = vset.pattern.permute.xlu0 0
      %519 = vperm.xlu0 %518, %v212
      %v520 = vpop.permute.xlu0 %519
      %523 = vset.pattern.permute.xlu0 0
      %524 = vperm.xlu0 %523, %v213
      %v525 = vpop.permute.xlu0 %524
      %v527 = vmul.f32 %v510, %v499
      %v528 = vmul.f32 %v510, %v500
      %v529 = vmul.f32 %v515, %v501
      %v530 = vmul.f32 %v515, %v502
      %v531 = vmul.f32 %v520, %v503
      %v532 = vmul.f32 %v520, %v504
      %v533 = vmul.f32 %v525, %v505
      %v534 = vmul.f32 %v525, %v506
      %v535 = vadd.f32 %v527, %v529
      %v536 = vadd.f32 %v535, %v531
      %v537 = vadd.f32 %v536, %v533
      %v538 = vrot.slane %v537, 4
      %v539 = vadd.f32 %v537, %v538
      %v540 = vrot.slane %v539, 2
      %v541 = vadd.f32 %v539, %v540
      %v542 = vrot.slane %v541, 1
      %v543 = vadd.f32 %v541, %v542
      %v544 = vadd.f32 %v528, %v530
      %v545 = vadd.f32 %v544, %v532
      %v546 = vadd.f32 %v545, %v534
      %v547 = vrot.slane %v546, 4
      %v548 = vadd.f32 %v546, %v547
      %v549 = vrot.slane %v548, 2
      %v550 = vadd.f32 %v548, %v549
      %v551 = vrot.slane %v550, 1
      %v552 = vadd.f32 %v550, %v551
      %554 = vset.pattern.permute.xlu0 0
      %555 = vperm.xlu0 %554, %v224
      %v556 = vpop.permute.xlu0 %555
      %v558 = vadd.f32 %v543, %v556
      %v559 = vadd.f32 %v552, %v556
      %v562 = vrot.slane %v559, 7
      %vm563 = vcmask 1040384
      %v564 = vsel %vm563, %v558, %v562
      %v566 = vlaneseq
      %vm567 = vcmp.ge.s32.totalorder %v566, 0
      %vm568 = vcmp.lt.s32.totalorder %v566, 256
      %vm569 = vmand %vm567, %vm568
      %570 = vst.msk [vmem:[%s197] sm:$0x3] %vm569, %v564
      %s571 = smul.u32 2, %s15
      %p572 = scmp.lt.s32.totalorder %s571, 3
      %s573 = scalar_select %p572, %s571, 3
      %s574 = scalar_lea.vmem %s4, %s573
      // Predicated region
      $region37: #{model_burgers_forward.1} parent=35 // pred_check
        %p575 = pneg %p122
      $region38: #{model_burgers_forward.1} parent=35 // pred_check_branch
        %577 = sbr.rel (%p575) target = $region40
      $region39: #{model_burgers_forward.1} parent=35 // pred_region
        %s578 = smul.u32 2, %s15
      $region40: #{model_burgers_forward.1} parent=35 // pred_fallthru
        _
    $region36: #{model_burgers_forward.1} parent=5 // pred_fallthru
      _
    %p579 = scmp.le.s32.totalorder 2, %s10
    // Predicated region
    $region41: #{model_burgers_forward.1} parent=5 // pred_check
      %p580 = pneg %p579
    $region42: #{model_burgers_forward.1} parent=5 // pred_check_branch
      %582 = sbr.rel (%p580) target = $region44
    $region43: #{model_burgers_forward.1} parent=5 // pred_region
      %s583 = ssub.s32 %s10, 2
      // Predicated region
      $region45: #{model_burgers_forward.1} parent=43 // pred_check
        %p584 = pneg %p128
      $region46: #{model_burgers_forward.1} parent=43 // pred_check_branch
        %586 = sbr.rel (%p584) target = $region48
      $region47: #{model_burgers_forward.1} parent=43 // pred_region
        %s587 = smul.u32 2, %s16
        %p588 = scmp.lt.s32.totalorder %s587, 3
        %s589 = scalar_select %p588, %s587, 3
        %s590 = scalar_lea.vmem %s4, %s589
      $region48: #{model_burgers_forward.1} parent=43 // pred_fallthru
        _
    $region44: #{model_burgers_forward.1} parent=5 // pred_fallthru
      _
  $region6: #{model_burgers_forward.1} parent=0 // loop_footer
    %s14 = sadd.s32 1, %s10
  $region7: #{model_burgers_forward.1} parent=0 // loop_footer_branch
    %9 = sbr.rel target = $region3
  $region8: #{model_burgers_forward.1} parent=0 // loop_exit
    _

</llo_original>
